<compile_context>
chip_gen: v6e
topology: v6e:2x2x1
jax: 0.10.0
libtpu: 0.0.40
codegen_flags: <defaults>
</compile_context>

<pallas_src>
import functools

import numpy as np

import jax
import jax.numpy as jnp
from jax.experimental import pallas as pl
from jax.experimental.pallas import tpu as pltpu


_INV_SQRT2 = 0.7071067811865475  # 1/sqrt(2) for the exact (erf) GELU


# ----------------------------------------------------------------------------
# Tiling helpers
# ----------------------------------------------------------------------------
def _pick_tile(dim, target):
    """Largest 128-multiple <= target that divides dim; else the full dim (legal)."""
    if dim <= target:
        return dim
    t = (target // 128) * 128
    while t >= 128:
        if dim % t == 0:
            return t
        t -= 128
    return dim


def _pick_m_tile(dim, target):
    """Row tile; prefers >=2 blocks along the parallel axis (keeps both v7x TCs busy)."""
    bm = _pick_tile(dim, target)
    if dim // bm < 2:
        half = bm // 2
        if half >= 16 and half % 16 == 0 and dim % half == 0:
            bm = half
    return bm


def _heads_per_group(num_heads, head_dim):
    """Smallest head group whose column width is a 128-lane multiple (else all heads)."""
    for hpg in range(1, num_heads + 1):
        if num_heads % hpg == 0 and (hpg * head_dim) % 128 == 0:
            return hpg
    return num_heads


def _vmem_limit(block_bytes):
    """Double-buffered block footprint + slack, clamped to a safe scoped-VMEM range."""
    return int(max(32 << 20, min(2 * block_bytes + (4 << 20), 56 << 20)))


# ----------------------------------------------------------------------------
# Full-K dense GEMM with optional fused activation / residual / LayerNorm
# ----------------------------------------------------------------------------
def _make_dense_kernel(activation, has_res, has_ln, eps):
    def kernel(*refs):
        x_ref, w_ref, b_ref = refs[0], refs[1], refs[2]
        pos = 3
        r_ref = g_ref = be_ref = None
        if has_res:
            r_ref = refs[pos]
            pos += 1
        if has_ln:
            g_ref, be_ref = refs[pos], refs[pos + 1]
            pos += 2
        o_ref = refs[pos]

        # bf16 operands feed the MXU at native rate; accumulate + epilogue in f32.
        y = jnp.dot(x_ref[...].astype(jnp.bfloat16), w_ref[...],
                    preferred_element_type=jnp.float32)
        y = y + b_ref[...]
        if activation == "gelu":
            # exact (erf) GELU, matching torch.nn.functional.gelu default
            y = 0.5 * y * (1.0 + jax.lax.erf(y * _INV_SQRT2))
        elif activation == "tanh":
            y = jnp.tanh(y)
        if has_res:
            y = y + r_ref[...].astype(jnp.float32)
        if has_ln:
            mu = jnp.mean(y, axis=-1, keepdims=True)
            var = jnp.mean(jnp.square(y - mu), axis=-1, keepdims=True)
            y = (y - mu) * jax.lax.rsqrt(var + eps) * g_ref[...] + be_ref[...]
        o_ref[...] = y.astype(o_ref.dtype)

    return kernel


def dense(x, w, b, *, activation="none", residual=None,
          ln_gamma=None, ln_beta=None, eps=1e-12,
          out_dtype=jnp.float32, tm=512, tn=512):
    """o = [LayerNorm](act(x @ w + b) [+ residual]); 2-D grid over (M, N), full K."""
    M, K = x.shape
    N = w.shape[1]
    has_res = residual is not None
    has_ln = ln_gamma is not None

    bm = _pick_m_tile(M, tm)
    bn = N if has_ln else _pick_tile(N, tn)   # LayerNorm needs the full row

    in_specs = [
        pl.BlockSpec((bm, K), lambda i, j: (i, 0)),   # full-K -> no accumulator RMW
        pl.BlockSpec((K, bn), lambda i, j: (0, j)),   # weight slab resident across i
        pl.BlockSpec((1, bn), lambda i, j: (0, j)),
    ]
    args = [x, w, b.reshape(1, N)]
    if has_res:
        in_specs.append(pl.BlockSpec((bm, bn), lambda i, j: (i, j)))
        args.append(residual)
    if has_ln:
        in_specs.append(pl.BlockSpec((1, bn), lambda i, j: (0, j)))
        in_specs.append(pl.BlockSpec((1, bn), lambda i, j: (0, j)))
        args.append(ln_gamma.reshape(1, N))
        args.append(ln_beta.reshape(1, N))

    x_b = np.dtype(x.dtype).itemsize
    w_b = np.dtype(w.dtype).itemsize
    o_b = np.dtype(out_dtype).itemsize
    blk_bytes = (bm * K * x_b + K * bn * w_b + bn * 4 + bm * bn * o_b
                 + (bm * bn * 4 if has_res else 0) + (2 * bn * 4 if has_ln else 0))
    bytes_accessed = (M * K * x_b + K * N * w_b + N * 4 + M * N * o_b
                      + (M * N * 4 if has_res else 0) + (2 * N * 4 if has_ln else 0))
    transcendentals = M * N if activation in ("gelu", "tanh") else 0

    return pl.pallas_call(
        _make_dense_kernel(activation, has_res, has_ln, eps),
        out_shape=jax.ShapeDtypeStruct((M, N), out_dtype),
        grid=(M // bm, N // bn),
        in_specs=in_specs,
        out_specs=pl.BlockSpec((bm, bn), lambda i, j: (i, j)),
        compiler_params=pltpu.CompilerParams(
            dimension_semantics=("parallel", "parallel"),
            vmem_limit_bytes=_vmem_limit(blk_bytes)),
        cost_estimate=pl.CostEstimate(
            flops=2 * M * N * K, transcendentals=transcendentals,
            bytes_accessed=bytes_accessed),
    )(*args)


# ----------------------------------------------------------------------------
# Row-tiled LayerNorm (embeddings; no residual)
# ----------------------------------------------------------------------------
def _ln_kernel(x_ref, g_ref, b_ref, o_ref, *, eps):
    x = x_ref[...]
    mu = jnp.mean(x, axis=-1, keepdims=True)
    var = jnp.mean(jnp.square(x - mu), axis=-1, keepdims=True)
    o_ref[...] = ((x - mu) * jax.lax.rsqrt(var + eps) * g_ref[...]
                  + b_ref[...]).astype(o_ref.dtype)


def layernorm(x, gamma, beta, eps=1e-12, tm=512):
    M, H = x.shape
    bm = _pick_m_tile(M, tm)
    return pl.pallas_call(
        functools.partial(_ln_kernel, eps=eps),
        out_shape=jax.ShapeDtypeStruct((M, H), jnp.float32),
        grid=(M // bm,),
        in_specs=[
            pl.BlockSpec((bm, H), lambda i: (i, 0)),
            pl.BlockSpec((1, H), lambda i: (0, 0)),
            pl.BlockSpec((1, H), lambda i: (0, 0)),
        ],
        out_specs=pl.BlockSpec((bm, H), lambda i: (i, 0)),
        compiler_params=pltpu.CompilerParams(
            dimension_semantics=("parallel",),
            vmem_limit_bytes=_vmem_limit(2 * bm * H * 4)),
    )(x, gamma.reshape(1, H), beta.reshape(1, H))


# ----------------------------------------------------------------------------
# Multi-head attention: grid over (batch, head-group); group slabs are 128-aligned
# ----------------------------------------------------------------------------
def _attn_kernel(qkv_ref, m_ref, o_ref, *, heads_per_group, head_dim):
    gw = heads_per_group * head_dim
    qkv = qkv_ref[0]                     # (S, 3*gw) bf16 group slab, loaded once
    mask = m_ref[0]                      # (1, S) additive, broadcasts over rows
    outs = []
    for h in range(heads_per_group):     # static unroll (2 heads/group for BERT-base)
        lo = h * head_dim
        q = qkv[:, lo:lo + head_dim]
        k = qkv[:, gw + lo:gw + lo + head_dim]
        v = qkv[:, 2 * gw + lo:2 * gw + lo + head_dim]
        # contract on the last axes directly (no materialized k.T);
        # the 1/sqrt(head_dim) scale is folded into the Q projection weights.
        s = jax.lax.dot_general(q, k, (((1,), (1,)), ((), ())),
                                preferred_element_type=jnp.float32) + mask
        s = s - jnp.max(s, axis=-1, keepdims=True)
        p = jnp.exp(s)
        p = p / jnp.sum(p, axis=-1, keepdims=True)   # exact divide (numerics parity)
        outs.append(jnp.dot(p.astype(v.dtype), v,
                            preferred_element_type=jnp.float32))
    # single lane-dense (S, gw) store of the whole head group
    o_ref[0] = jnp.concatenate(outs, axis=-1).astype(o_ref.dtype)


def attention(qkv, add_mask, heads_per_group, head_dim):
    """qkv: (B, S, 3H) in head-group-major column layout; add_mask: (B, 1, S)."""
    B, S, H3 = qkv.shape
    H = H3 // 3
    gw = heads_per_group * head_dim
    G = H // gw
    blk_bytes = (S * 3 * gw * 2 + S * 4 + S * gw * 2
                 + 2 * heads_per_group * S * S * 4)
    return pl.pallas_call(
        functools.partial(_attn_kernel, heads_per_group=heads_per_group,
                          head_dim=head_dim),
        out_shape=jax.ShapeDtypeStruct((B, S, H), jnp.bfloat16),
        grid=(B, G),
        in_specs=[
            pl.BlockSpec((1, S, 3 * gw), lambda b, g: (b, 0, g)),
            pl.BlockSpec((1, 1, S), lambda b, g: (b, 0, 0)),
        ],
        out_specs=pl.BlockSpec((1, S, gw), lambda b, g: (b, 0, g)),
        compiler_params=pltpu.CompilerParams(
            dimension_semantics=("parallel", "parallel"),
            vmem_limit_bytes=_vmem_limit(blk_bytes)),
    )(qkv, add_mask)


# ----------------------------------------------------------------------------
# Fused head: pooler (dense + tanh) -> classifier dense -> log_softmax
# ----------------------------------------------------------------------------
def _head_kernel(x_ref, pw_ref, pb_ref, cw_ref, cb_ref, o_ref):
    pooled = jnp.tanh(jnp.dot(x_ref[...].astype(jnp.bfloat16), pw_ref[...],
                              preferred_element_type=jnp.float32) + pb_ref[...])
    # dropout is identity at inference
    logits = jnp.dot(pooled.astype(jnp.bfloat16), cw_ref[...],
                     preferred_element_type=jnp.float32) + cb_ref[...]
    m = jnp.max(logits, axis=-1, keepdims=True)
    z = logits - m
    o_ref[...] = z - jnp.log(jnp.sum(jnp.exp(z), axis=-1, keepdims=True))


def classifier_head(cls, pooler_w, pooler_b, cls_w, cls_b):
    B, H = cls.shape
    C = cls_w.shape[1]
    return pl.pallas_call(
        _head_kernel,
        out_shape=jax.ShapeDtypeStruct((B, C), jnp.float32),
        grid=(1,),
        in_specs=[
            pl.BlockSpec((B, H), lambda i: (0, 0)),
            pl.BlockSpec((H, H), lambda i: (0, 0)),
            pl.BlockSpec((1, H), lambda i: (0, 0)),
            pl.BlockSpec((H, C), lambda i: (0, 0)),
            pl.BlockSpec((1, C), lambda i: (0, 0)),
        ],
        out_specs=pl.BlockSpec((B, C), lambda i: (0, 0)),
    )(cls, pooler_w, pooler_b.reshape(1, H), cls_w, cls_b.reshape(1, C))


# ----------------------------------------------------------------------------
# Parameter construction (deterministic, synthetic; bf16 matmul weights,
# QKV fused in head-group-major layout, attention scale folded into Q)
# ----------------------------------------------------------------------------
def make_params(key, cfg):
    H = cfg["hidden_size"]
    I = cfg["intermediate_size"]
    V = cfg["vocab_size"]
    P = cfg["max_position_embeddings"]
    T = cfg["type_vocab_size"]
    L = cfg["num_hidden_layers"]
    C = cfg["num_labels"]
    nh = cfg["num_attention_heads"]
    Dh = H // nh
    hpg = _heads_per_group(nh, Dh)
    scale = 1.0 / float(Dh) ** 0.5

    def nrm(k, shape, std=0.02):
        return (std * jax.random.normal(k, shape)).astype(jnp.float32)

    keys = iter(jax.random.split(key, 8 + 12 * L))
    p = {
        "heads_per_group": hpg,
        "word_emb": nrm(next(keys), (V, H)),
        "pos_emb": nrm(next(keys), (P, H)),
        "type_emb": nrm(next(keys), (T, H)),
        "emb_ln_g": jnp.ones((H,), jnp.float32),
        "emb_ln_b": jnp.zeros((H,), jnp.float32),
        "layers": [],
        "pooler_w": nrm(next(keys), (H, H)).astype(jnp.bfloat16),
        "pooler_b": jnp.zeros((H,), jnp.float32),
        "cls_w": nrm(next(keys), (H, C)).astype(jnp.bfloat16),
        "cls_b": jnp.zeros((C,), jnp.float32),
    }
    for _ in range(L):
        # fold the 1/sqrt(head_dim) attention scale into the Q projection (f32, then bf16)
        q_w = nrm(next(keys), (H, H)) * scale
        k_w = nrm(next(keys), (H, H))
        v_w = nrm(next(keys), (H, H))
        q_b = jnp.zeros((H,), jnp.float32) * scale
        k_b = jnp.zeros((H,), jnp.float32)
        v_b = jnp.zeros((H,), jnp.float32)
        # head-group-major fused layout: per group g of hpg heads, columns are
        # [Q_g | K_g | V_g]; each slab width (hpg*Dh) is a 128-lane multiple for
        # real BERT shapes, so attention slices are vreg-aligned views.
        wcols, bcols = [], []
        for g in range(nh // hpg):
            sl = slice(g * hpg * Dh, (g + 1) * hpg * Dh)
            wcols += [q_w[:, sl], k_w[:, sl], v_w[:, sl]]
            bcols += [q_b[sl], k_b[sl], v_b[sl]]
        qkv_w = jnp.concatenate(wcols, axis=1).astype(jnp.bfloat16)
        qkv_b = jnp.concatenate(bcols, axis=0)  # stays f32 (added in f32 epilogue)
        p["layers"].append({
            "qkv_w": qkv_w, "qkv_b": qkv_b,
            "ao_w": nrm(next(keys), (H, H)).astype(jnp.bfloat16),
            "ao_b": jnp.zeros((H,), jnp.float32),
            "ln1_g": jnp.ones((H,), jnp.float32), "ln1_b": jnp.zeros((H,), jnp.float32),
            "ff1_w": nrm(next(keys), (H, I)).astype(jnp.bfloat16),
            "ff1_b": jnp.zeros((I,), jnp.float32),
            "ff2_w": nrm(next(keys), (I, H)).astype(jnp.bfloat16),
            "ff2_b": jnp.zeros((H,), jnp.float32),
            "ln2_g": jnp.ones((H,), jnp.float32), "ln2_b": jnp.zeros((H,), jnp.float32),
        })
    return p


# ----------------------------------------------------------------------------
# Forward pass (glue in JAX, hot paths in Pallas)
# ----------------------------------------------------------------------------
def bert_sent_classifier_forward(params, cfg, input_ids, token_type_ids,
                                 attention_mask):
    B, S = input_ids.shape
    H = cfg["hidden_size"]
    nh = cfg["num_attention_heads"]
    Dh = H // nh
    hpg = params["heads_per_group"]
    M = B * S

    # --- embeddings (table gathers stay in XLA glue; LN is a Pallas kernel) ---
    pos_ids = jnp.arange(S, dtype=jnp.int32)
    emb = (jnp.take(params["word_emb"], input_ids, axis=0)
           + jnp.take(params["pos_emb"], pos_ids, axis=0)[None, :, :]
           + jnp.take(params["type_emb"], token_type_ids, axis=0))
    x = layernorm(emb.reshape(M, H), params["emb_ln_g"], params["emb_ln_b"])

    # additive attention mask (B, 1, S): 0 where attended, -1e4 where padded
    add_mask = ((1.0 - attention_mask.astype(jnp.float32)) * -10000.0
                ).reshape(B, 1, S)

    for lp in params["layers"]:
        # fused Q/K/V projection: one (M,H)x(H,3H) bf16 GEMM, bf16 output
        # (halves the HBM round trip between the projection and attention)
        qkv = dense(x, lp["qkv_w"], lp["qkv_b"], out_dtype=jnp.bfloat16)
        # attention over one head group per grid step; group slabs are 128-aligned
        ctx = attention(qkv.reshape(B, S, 3 * H), add_mask, hpg, Dh).reshape(M, H)
        # attention-output projection fused with residual add + LayerNorm
        x = dense(ctx, lp["ao_w"], lp["ao_b"], residual=x,
                  ln_gamma=lp["ln1_g"], ln_beta=lp["ln1_b"])
        # feed-forward: GEMM+GELU (bf16 out), then GEMM fused with residual + LN
        ff = dense(x, lp["ff1_w"], lp["ff1_b"], activation="gelu",
                   out_dtype=jnp.bfloat16)
        x = dense(ff, lp["ff2_w"], lp["ff2_b"], residual=x,
                  ln_gamma=lp["ln2_g"], ln_beta=lp["ln2_b"])

    # pooler (CLS token, dense+tanh) -> dropout (identity at eval)
    # -> classifier -> log_softmax, all fused into one tiny kernel
    # TODO(synk): training-mode dropout omitted (identity at inference)
    cls = x.reshape(B, S, H)[:, 0, :]
    return classifier_head(cls, params["pooler_w"], params["pooler_b"],
                           params["cls_w"], params["cls_b"])


# ----------------------------------------------------------------------------
# Main
# ----------------------------------------------------------------------------
if __name__ == "__main__":
    cfg = dict(
        vocab_size=50,
        hidden_size=32,
        num_hidden_layers=2,
        num_attention_heads=2,
        intermediate_size=64,
        max_position_embeddings=16,
        type_vocab_size=2,
        num_labels=3,
    )
    B, S = 2, 8

    key = jax.random.PRNGKey(0)
    k_param, k_ids, k_type = jax.random.split(key, 3)
    params = make_params(k_param, cfg)

    input_ids = jax.random.randint(k_ids, (B, S), 0, cfg["vocab_size"],
                                   dtype=jnp.int32)
    token_type_ids = jnp.zeros((B, S), dtype=jnp.int32)
    attention_mask = jnp.ones((B, S), dtype=jnp.int32)
    # pad out the last two tokens of the second example
    attention_mask = attention_mask.at[1, 6:].set(0)

    out = bert_sent_classifier_forward(params, cfg, input_ids,
                                       token_type_ids, attention_mask)
    out = jax.block_until_ready(out)
    assert out.shape == (B, cfg["num_labels"])
    # rows of log_softmax must exp-sum to 1
    assert jnp.allclose(jnp.sum(jnp.exp(out), axis=-1), 1.0, atol=1e-4)
    print("KERNEL_OK")
</pallas_src>

<mosaic_0001>
module attributes {stable_mosaic.version = 11 : i64} {
  func.func @_ln_kernel(%arg0: i32, %arg1: memref<16x32xf32, #tpu.memory_space<vmem>>, %arg2: memref<1x32xf32, #tpu.memory_space<vmem>>, %arg3: memref<1x32xf32, #tpu.memory_space<vmem>>, %arg4: memref<16x32xf32, #tpu.memory_space<vmem>>) attributes {dimension_semantics = [#tpu.dimension_semantics<parallel>], iteration_bounds = array<i64: 1>, scalar_prefetch = 0 : i64, scratch_operands = 0 : i64, tpu.core_type = #tpu.core_type<tc>, window_params = [{transform_indices = @transform_0, window_bounds = array<i64: 16, 32>}, {pipeline_mode = #tpu.pipeline_mode<synchronous>, transform_indices = @transform_1, window_bounds = array<i64: 1, 32>}, {pipeline_mode = #tpu.pipeline_mode<synchronous>, transform_indices = @transform_2, window_bounds = array<i64: 1, 32>}, {transform_indices = @transform_3, window_bounds = array<i64: 16, 32>}]} {
    %c0 = arith.constant 0 : index
    %c0_0 = arith.constant 0 : index
    %0 = vector.load %arg1[%c0, %c0_0] : memref<16x32xf32, #tpu.memory_space<vmem>>, vector<16x32xf32>
    %cst = arith.constant dense<0.000000e+00> : vector<16xf32>
    %1 = vector.multi_reduction <add>, %0, %cst [1] : vector<16x32xf32> to vector<16xf32>
    %2 = vector.shape_cast %1 : vector<16xf32> to vector<16x1xf32>
    %cst_1 = arith.constant 3.200000e+01 : f32
    %3 = vector.broadcast %cst_1 : f32 to vector<16x1xf32>
    %4 = arith.divf %2, %3 : vector<16x1xf32>
    %5 = vector.broadcast %4 : vector<16x1xf32> to vector<16x32xf32>
    %6 = arith.subf %0, %5 : vector<16x32xf32>
    %7 = arith.mulf %6, %6 : vector<16x32xf32>
    %cst_2 = arith.constant dense<0.000000e+00> : vector<16xf32>
    %8 = vector.multi_reduction <add>, %7, %cst_2 [1] : vector<16x32xf32> to vector<16xf32>
    %9 = vector.shape_cast %8 : vector<16xf32> to vector<16x1xf32>
    %cst_3 = arith.constant 3.200000e+01 : f32
    %10 = vector.broadcast %cst_3 : f32 to vector<16x1xf32>
    %11 = arith.divf %9, %10 : vector<16x1xf32>
    %12 = vector.broadcast %4 : vector<16x1xf32> to vector<16x32xf32>
    %13 = arith.subf %0, %12 : vector<16x32xf32>
    %cst_4 = arith.constant 9.99999996E-13 : f32
    %14 = vector.broadcast %cst_4 : f32 to vector<16x1xf32>
    %15 = arith.addf %11, %14 : vector<16x1xf32>
    %16 = math.rsqrt %15 : vector<16x1xf32>
    %17 = vector.broadcast %16 : vector<16x1xf32> to vector<16x32xf32>
    %18 = arith.mulf %13, %17 : vector<16x32xf32>
    %c0_5 = arith.constant 0 : index
    %c0_6 = arith.constant 0 : index
    %19 = vector.load %arg2[%c0_5, %c0_6] : memref<1x32xf32, #tpu.memory_space<vmem>>, vector<1x32xf32>
    %20 = vector.broadcast %19 : vector<1x32xf32> to vector<16x32xf32>
    %21 = arith.mulf %18, %20 : vector<16x32xf32>
    %c0_7 = arith.constant 0 : index
    %c0_8 = arith.constant 0 : index
    %22 = vector.load %arg3[%c0_7, %c0_8] : memref<1x32xf32, #tpu.memory_space<vmem>>, vector<1x32xf32>
    %23 = vector.broadcast %22 : vector<1x32xf32> to vector<16x32xf32>
    %24 = arith.addf %21, %23 : vector<16x32xf32>
    %c0_9 = arith.constant 0 : index
    %c0_10 = arith.constant 0 : index
    %25 = vector.load %arg4[%c0_9, %c0_10] : memref<16x32xf32, #tpu.memory_space<vmem>>, vector<16x32xf32>
    tpu.vector_store %arg4[%c0_9, %c0_10], %24 {strides = array<i32>} : memref<16x32xf32, #tpu.memory_space<vmem>>, vector<16x32xf32>,
    return
  }
  func.func @transform_0(%arg0: i32) -> (i32, i32) {
    %c0_i32 = arith.constant 0 : i32
    %c0_i32_0 = arith.constant 0 : i32
    return %arg0, %c0_i32 : i32, i32
  }
  func.func @transform_1(%arg0: i32) -> (i32, i32) {
    %c0_i32 = arith.constant 0 : i32
    %c0_i32_0 = arith.constant 0 : i32
    %c0_i32_1 = arith.constant 0 : i32
    return %c0_i32, %c0_i32_0 : i32, i32
  }
  func.func @transform_2(%arg0: i32) -> (i32, i32) {
    %c0_i32 = arith.constant 0 : i32
    %c0_i32_0 = arith.constant 0 : i32
    %c0_i32_1 = arith.constant 0 : i32
    return %c0_i32, %c0_i32_0 : i32, i32
  }
  func.func @transform_3(%arg0: i32) -> (i32, i32) {
    %c0_i32 = arith.constant 0 : i32
    %c0_i32_0 = arith.constant 0 : i32
    return %arg0, %c0_i32 : i32, i32
  }
}

</mosaic_0001>

<llo_original>
// kernel: tpu_custom_call.1
$region0: #{tpu_custom_call.1}
  #allocation0 [shape = 'u32[]', space=smem, size = 0x4, offset = 0x4, fixed_abs, tag = 'smem constant byte address 0x4 - core index']
  #allocation1 [shape = 'u32[144,128]{1,0:T(1,128)}', space=vmem, size = 0x12000, scoped, tag = 'internal scratch']
  %s0 = inlined_call_operand.hbm [shape: f32[16,32], index: 0, kind: input, shape index: {}]
  %s1 = inlined_call_operand.vmem [shape: f32[1,32], index: 1, kind: input, shape index: {}]
  %s2 = inlined_call_operand.vmem [shape: f32[1,32], index: 2, kind: input, shape index: {}]
  %s3 = inlined_call_operand.hbm [shape: f32[16,32], index: 3, kind: output, shape index: {}]
  %s4 = sld [smem:[#allocation0]]
  $region26: #{tpu_custom_call.1} parent=0
    _
  %s6 = ssub.s32 1, %s4
  %s7 = scalar_select 0, %s6, %s4
  $region1: #{tpu_custom_call.1} parent=0
    #allocation2 [shape = 'u8[8192]{0}', space=vmem, size = 0x2000, scoped, tag = 'input window, operand 0, single buffered']
    #allocation3 [shape = 's32[1]{0}', space=sflag, size = 0x4, scoped, tag = 'scoped memory for tpu_custom_call.1']
    #allocation4 [shape = 's32[1]{0}', space=sflag, size = 0x4, scoped, tag = 'scoped memory for tpu_custom_call.1']
    #allocation5 [shape = 'u8[8192]{0}', space=vmem, size = 0x2000, scoped, tag = 'output window, operand 0, single buffered']
    %8 = vsyncpa [#allocation3], 0
    %9 = vsyncpa [#allocation4], 0
    // Predicated region
    $region2: #{tpu_custom_call.1} parent=1 // pred_check
      _
    $region3: #{tpu_custom_call.1} parent=1 // pred_check_branch
      %11 = sbr.rel (0) target = $region5
    $region4: #{tpu_custom_call.1} parent=1 // pred_region
      %s13 = ssub.s32 256, 256
      %14 = vsyncadd [#allocation3], %s13
      %s15 = sshll.u32 [#allocation2], 4
      %s16 = int_to_ptr.vmem [resolvable:$true] %s15
      %21 = dma.hbm_to_vmem [thread:$0]  %s0, 256, %s16, [#allocation3], 128, 128, 8
    $region5: #{tpu_custom_call.1} parent=1 // pred_fallthru
      _
    // Predicated region
    $region6: #{tpu_custom_call.1} parent=1 // pred_check
      _
    $region7: #{tpu_custom_call.1} parent=1 // pred_check_branch
      %23 = sbr.rel (0) target = $region9
    $region8: #{tpu_custom_call.1} parent=1 // pred_region
      _
    $region9: #{tpu_custom_call.1} parent=1 // pred_fallthru
      _
    // Predicated region
    $region10: #{tpu_custom_call.1} parent=1 // pred_check
      _
    $region11: #{tpu_custom_call.1} parent=1 // pred_check_branch
      %25 = sbr.rel (0) target = $region13
    $region12: #{tpu_custom_call.1} parent=1 // pred_region
      _
    $region13: #{tpu_custom_call.1} parent=1 // pred_fallthru
      _
    // Predicated region
    $region14: #{tpu_custom_call.1} parent=1 // pred_check
      _
    $region15: #{tpu_custom_call.1} parent=1 // pred_check_branch
      %27 = sbr.rel (0) target = $region17
    $region16: #{tpu_custom_call.1} parent=1 // pred_region
      %28 = dma.done [#allocation3], 256
    $region17: #{tpu_custom_call.1} parent=1 // pred_fallthru
      _
    %v29 = vld [vmem:[#allocation2] sm:$0xff]
    %v30 = vld [vmem:[#allocation2 + $0x8] sm:$0xff]
    %vm31 = vcmask 261120
    %v32 = vsel %vm31, %v29, 0.0
    %33 = vadd.xlane.f32.xlu0 %v32
    %v34 = vpop.xlane.xlu0 %33
    %v35 = vsel %vm31, %v30, 0.0
    %36 = vadd.xlane.f32.xlu0 %v35
    %v37 = vpop.xlane.xlu0 %36
    %v38 = vrcp.pop 32.0
    %v39 = vmul.f32 %v34, %v38
    %v40 = vmul.f32 %v37, %v38
    %v41 = vsub.f32 %v29, %v39
    %v42 = vsub.f32 %v30, %v40
    %v43 = vmul.f32 %v41, %v41
    %v44 = vmul.f32 %v42, %v42
    %v45 = vsel %vm31, %v43, 0.0
    %46 = vadd.xlane.f32.xlu0 %v45
    %v47 = vpop.xlane.xlu0 %46
    %v48 = vsel %vm31, %v44, 0.0
    %49 = vadd.xlane.f32.xlu0 %v48
    %v50 = vpop.xlane.xlu0 %49
    %v51 = vmul.f32 %v47, %v38
    %v52 = vmul.f32 %v50, %v38
    %v53 = vadd.f32 %v51, 1e-12
    %v54 = vadd.f32 %v52, 1e-12
    %v55 = vrsqrt.pop %v53
    %v56 = vrsqrt.pop %v54
    %v57 = vmul.f32 %v41, %v55
    %v58 = vmul.f32 %v42, %v56
    %v59 = vld [vmem:[%s1] sm:$0x1]
    %v61 = vlaneseq
    %v62 = vshrl.u32 %v61, 7
    %v63 = vsub.s32 0, %v62
    %v64 = vrot.slane %v59, %v63
    %v66 = vmul.f32 %v57, %v64
    %v67 = vmul.f32 %v58, %v64
    %v68 = vld [vmem:[%s2] sm:$0x1]
    %v70 = vlaneseq
    %v71 = vshrl.u32 %v70, 7
    %v72 = vsub.s32 0, %v71
    %v73 = vrot.slane %v68, %v72
    %v75 = vadd.f32 %v66, %v73
    %v76 = vadd.f32 %v67, %v73
    %77 = vst.msk [vmem:[#allocation5] sm:$0xff] %vm31, %v75
    %78 = vst.msk [vmem:[#allocation5 + $0x8] sm:$0xff] %vm31, %v76
    // Predicated region
    $region18: #{tpu_custom_call.1} parent=1 // pred_check
      _
    $region19: #{tpu_custom_call.1} parent=1 // pred_check_branch
      %80 = sbr.rel (0) target = $region21
    $region20: #{tpu_custom_call.1} parent=1 // pred_region
      %s82 = ssub.s32 256, 256
      %83 = vsyncadd [#allocation4], %s82
      %s84 = sshll.u32 [#allocation5], 4
      %s85 = int_to_ptr.vmem [resolvable:$true] %s84
      %90 = dma.vmem_to_hbm [thread:$0]  %s85, 256, %s3, [#allocation4], 128, 128, 8
    $region21: #{tpu_custom_call.1} parent=1 // pred_fallthru
      _
    // Predicated region
    $region22: #{tpu_custom_call.1} parent=1 // pred_check
      _
    $region23: #{tpu_custom_call.1} parent=1 // pred_check_branch
      %92 = sbr.rel (0) target = $region25
    $region24: #{tpu_custom_call.1} parent=1 // pred_region
      %93 = dma.done [#allocation4], 256
    $region25: #{tpu_custom_call.1} parent=1 // pred_fallthru
      _
    %94 = vsyncpa [#allocation3], 1
    %95 = vsyncpa [#allocation4], 1

</llo_original>
